<compile_context>
chip_gen: v7x
topology: tpu7x:2x2x1
jax: 0.10.0
libtpu: 0.0.40
codegen_flags: <defaults>
</compile_context>

<pallas_src>
import math

import jax
import jax.numpy as jnp
from jax import lax
from jax.experimental import pallas as pl
from jax.experimental.pallas import tpu as pltpu


def attn_kernel(hid_ref, enc_ref, par_ref, out_ref, ctx_ref):
    # hid_ref: (B, H)       -- decoder hidden (NOT repeated over T)
    # enc_ref: (B*T, 2H)    -- encoder outputs, flattened over (B, T)
    # par_ref: (3H+16, H)   -- packed [W_h (H,H); W_e (2H,H); bias row @3H; v row @3H+8]
    # out_ref: (B, T)       -- softmax attention energies (reshaped to (B,1,T) outside)
    # ctx_ref: (B, 2H)      -- fused context = attn_weights @ encoder_outputs
    B, T = out_ref.shape
    H = hid_ref.shape[1]

    w_h = par_ref[0:H, :]                      # (H, H)   acts on the hidden part
    w_e = par_ref[H:3 * H, :]                  # (2H, H)  acts on the encoder part
    b = par_ref[3 * H:3 * H + 1, :]            # (1, H)   bias (8-aligned sublane row)
    v_row = par_ref[3 * H + 8:3 * H + 9, :]    # (1, H)   scoring vector v

    # Hidden projection computed ONCE (not T times): (B, H)
    hproj = jnp.dot(hid_ref[...], w_h, preferred_element_type=jnp.float32) + b
    # Encoder projection for all B*T rows in one MXU pass: (B*T, H)
    eproj = jnp.dot(enc_ref[...], w_e, preferred_element_type=jnp.float32)

    # Per-batch scoring + softmax + fused context.  B is small & static -> unrolls.
    for bi in range(B):
        # energy = tanh(hproj_b broadcast over T + eproj_b)        (T, H)
        e_b = jnp.tanh(eproj[bi * T:(bi + 1) * T, :] + hproj[bi:bi + 1, :])

        # score: v @ e_b^T via the MXU's native transposed-RHS form (no XLU transpose)
        s = lax.dot_general(
            v_row, e_b,
            dimension_numbers=(((1,), (1,)), ((), ())),            # contract H with H
            preferred_element_type=jnp.float32,
        )                                                          # (1, T)

        # softmax over T (lane axis); exact divide (kernel is dispatch bound).
        m = jnp.max(s, axis=-1, keepdims=True)
        p = jnp.exp(s - m)
        p = p / jnp.sum(p, axis=-1, keepdims=True)                 # (1, T)
        out_ref[bi:bi + 1, :] = p

        # Fused downstream context: (1, T) @ (T, 2H) -> (1, 2H); enc already in VMEM.
        enc_b = enc_ref[bi * T:(bi + 1) * T, :]
        ctx_ref[bi:bi + 1, :] = jnp.dot(
            p, enc_b, preferred_element_type=jnp.float32
        )


def prepare_attn_params(w_attn, b_attn, v):
    """One-time (decode-loop-invariant) parameter packing.

    Packs W_attn^T (split implicitly into W_h / W_e by row range), bias and v
    into a single contiguous slab so the kernel takes one constant operand.
    bias / v live on 8-aligned sublane rows (3H and 3H+8).
    """
    H = b_attn.shape[0]
    assert w_attn.shape == (H, 3 * H)
    w_t = jnp.transpose(w_attn).astype(jnp.float32)     # (3H, H)
    slab = jnp.zeros((3 * H + 16, H), dtype=jnp.float32)
    slab = slab.at[:3 * H, :].set(w_t)
    slab = slab.at[3 * H, :].set(b_attn.astype(jnp.float32))
    slab = slab.at[3 * H + 8, :].set(v.astype(jnp.float32))
    return slab


def attn_forward(hidden, encoder_outputs, params):
    """hidden: (1, B, H); encoder_outputs: (B, T, 2H); params: packed slab.

    Returns (attn_weights (B,1,T), context (B,2H)).  attn_weights matches the
    PyTorch module's forward output exactly; context is the fused downstream
    bmm (attn_weights @ encoder_outputs) emitted for free from VMEM-resident data.
    """
    B, T, H2 = encoder_outputs.shape
    H = hidden.shape[-1]
    assert H2 == 2 * H
    assert params.shape == (3 * H + 16, H)

    hid2 = hidden.reshape(B, H)               # (1,B,H) -> (B,H); layers*dirs == 1
    enc2 = encoder_outputs.reshape(B * T, H2)  # contiguous reshape, layout glue only

    out, ctx = pl.pallas_call(
        attn_kernel,
        out_shape=(
            jax.ShapeDtypeStruct((B, T), jnp.float32),
            jax.ShapeDtypeStruct((B, H2), jnp.float32),
        ),
        in_specs=[
            pl.BlockSpec(memory_space=pltpu.MemorySpace.VMEM) for _ in range(3)
        ],
        out_specs=(
            pl.BlockSpec(memory_space=pltpu.MemorySpace.VMEM),
            pl.BlockSpec(memory_space=pltpu.MemorySpace.VMEM),
        ),
    )(hid2, enc2, params)

    return out.reshape(B, 1, T), ctx


def attn_reference(hidden, encoder_outputs, w_attn, b_attn, v):
    """Pure-JAX reference mirroring the PyTorch forward (+ the fused context)."""
    B, T, _ = encoder_outputs.shape
    H = hidden.shape[-1]
    hid_rep = jnp.broadcast_to(jnp.transpose(hidden, (1, 0, 2)), (B, T, H))
    x = jnp.concatenate([hid_rep, encoder_outputs], axis=-1)         # (B, T, 3H)
    e = jnp.tanh(
        jnp.einsum("btk,hk->bth", x, w_attn, precision=lax.Precision.HIGHEST)
        + b_attn
    )                                                                # (B, T, H)
    s = jnp.einsum("h,bth->bt", v, e,
                   precision=lax.Precision.HIGHEST)[:, None, :]      # (B, 1, T)
    attn_w = jax.nn.softmax(s, axis=2)                               # (B, 1, T)
    ctx = jnp.einsum("bqt,btd->bqd", attn_w, encoder_outputs,
                     precision=lax.Precision.HIGHEST)[:, 0, :]       # (B, 2H)
    return attn_w, ctx


if __name__ == "__main__":
    H = 32   # hidden_size
    B = 2    # batch
    T = 8    # encoder sequence length

    key = jax.random.PRNGKey(0)
    k_hid, k_enc, k_w, k_b, k_v = jax.random.split(key, 5)

    hidden = jax.random.normal(k_hid, (1, B, H), dtype=jnp.float32)
    encoder_outputs = jax.random.normal(k_enc, (B, T, 2 * H), dtype=jnp.float32)

    # nn.Linear(3H, H): weight (H, 3H), bias (H,), default uniform(+-1/sqrt(3H)) init.
    lim = 1.0 / math.sqrt(3 * H)
    w_attn = jax.random.uniform(k_w, (H, 3 * H), minval=-lim, maxval=lim,
                                dtype=jnp.float32)
    b_attn = jax.random.uniform(k_b, (H,), minval=-lim, maxval=lim,
                                dtype=jnp.float32)
    # self.v ~ Normal(0, 1/sqrt(H))
    v = (1.0 / math.sqrt(H)) * jax.random.normal(k_v, (H,), dtype=jnp.float32)

    # Parameter prep happens ONCE, outside the (jitted) decode step.
    params = prepare_attn_params(w_attn, b_attn, v)
    step = jax.jit(attn_forward)

    attn_w, context = step(hidden, encoder_outputs, params)
    attn_w, context = jax.block_until_ready((attn_w, context))

    ref_w, ref_ctx = attn_reference(hidden, encoder_outputs, w_attn, b_attn, v)
    assert attn_w.shape == (B, 1, T)
    assert context.shape == (B, 2 * H)
    # Exact softmax (no approx reciprocal) -> tight tolerance.
    assert jnp.allclose(attn_w, ref_w, rtol=1e-4, atol=1e-4), float(
        jnp.max(jnp.abs(attn_w - ref_w))
    )
    assert jnp.allclose(context, ref_ctx, rtol=1e-4, atol=1e-4), float(
        jnp.max(jnp.abs(context - ref_ctx))
    )

    print("KERNEL_OK")
</pallas_src>

<mosaic_0001>
module attributes {stable_mosaic.version = 11 : i64} {
  func.func @attn_kernel(%arg0: memref<2x32xf32, #tpu.memory_space<vmem>>, %arg1: memref<16x64xf32, #tpu.memory_space<vmem>>, %arg2: memref<112x32xf32, #tpu.memory_space<vmem>>, %arg3: memref<2x8xf32, #tpu.memory_space<vmem>>, %arg4: memref<2x64xf32, #tpu.memory_space<vmem>>) attributes {dimension_semantics = [], scalar_prefetch = 0 : i64, scratch_operands = 0 : i64, tpu.core_type = #tpu.core_type<tc>} {
    %c0 = arith.constant 0 : index
    %c0_0 = arith.constant 0 : index
    %0 = vector.load %arg2[%c0, %c0_0] : memref<112x32xf32, #tpu.memory_space<vmem>>, vector<32x32xf32>
    %c32 = arith.constant 32 : index
    %c0_1 = arith.constant 0 : index
    %1 = vector.load %arg2[%c32, %c0_1] : memref<112x32xf32, #tpu.memory_space<vmem>>, vector<64x32xf32>
    %c96 = arith.constant 96 : index
    %c0_2 = arith.constant 0 : index
    %2 = vector.load %arg2[%c96, %c0_2] : memref<112x32xf32, #tpu.memory_space<vmem>>, vector<1x32xf32>
    %c104 = arith.constant 104 : index
    %c0_3 = arith.constant 0 : index
    %3 = vector.load %arg2[%c104, %c0_3] : memref<112x32xf32, #tpu.memory_space<vmem>>, vector<1x32xf32>
    %c0_4 = arith.constant 0 : index
    %c0_5 = arith.constant 0 : index
    %4 = vector.load %arg0[%c0_4, %c0_5] : memref<2x32xf32, #tpu.memory_space<vmem>>, vector<2x32xf32>
    %cst = arith.constant dense<0.000000e+00> : vector<2x32xf32>
    %5 = tpu.matmul %4, %0, %cst {dimension_numbers = #tpu.dot_dimension_numbers<[1], [0], [0], [1], [0, 0, 1, 1], [], []>} : vector<2x32xf32>, vector<32x32xf32>, vector<2x32xf32> -> vector<2x32xf32>
    %6 = vector.broadcast %2 : vector<1x32xf32> to vector<2x32xf32>
    %7 = arith.addf %5, %6 : vector<2x32xf32>
    %c0_6 = arith.constant 0 : index
    %c0_7 = arith.constant 0 : index
    %8 = vector.load %arg1[%c0_6, %c0_7] : memref<16x64xf32, #tpu.memory_space<vmem>>, vector<16x64xf32>
    %cst_8 = arith.constant dense<0.000000e+00> : vector<16x32xf32>
    %9 = tpu.matmul %8, %1, %cst_8 {dimension_numbers = #tpu.dot_dimension_numbers<[1], [0], [0], [1], [0, 0, 1, 1], [], []>} : vector<16x64xf32>, vector<64x32xf32>, vector<16x32xf32> -> vector<16x32xf32>
    %10 = vector.extract_strided_slice %9 {offsets = [0, 0], sizes = [8, 32], strides = [1, 1]} : vector<16x32xf32> to vector<8x32xf32>
    %11 = vector.extract_strided_slice %7 {offsets = [0, 0], sizes = [1, 32], strides = [1, 1]} : vector<2x32xf32> to vector<1x32xf32>
    %12 = vector.broadcast %11 : vector<1x32xf32> to vector<8x32xf32>
    %13 = arith.addf %10, %12 : vector<8x32xf32>
    %14 = math.tanh %13 : vector<8x32xf32>
    %cst_9 = arith.constant dense<0.000000e+00> : vector<1x8xf32>
    %15 = tpu.matmul %3, %14, %cst_9 {dimension_numbers = #tpu.dot_dimension_numbers<[1], [1], [0], [0], [0, 0, 1, 0], [], []>} : vector<1x32xf32>, vector<8x32xf32>, vector<1x8xf32> -> vector<1x8xf32>
    %cst_10 = arith.constant dense<0xFF800000> : vector<1xf32>
    %16 = vector.multi_reduction <maximumf>, %15, %cst_10 [1] : vector<1x8xf32> to vector<1xf32>
    %17 = vector.shape_cast %16 : vector<1xf32> to vector<1x1xf32>
    %18 = vector.broadcast %17 : vector<1x1xf32> to vector<1x8xf32>
    %19 = arith.subf %15, %18 : vector<1x8xf32>
    %20 = math.exp %19 : vector<1x8xf32>
    %cst_11 = arith.constant dense<0.000000e+00> : vector<1xf32>
    %21 = vector.multi_reduction <add>, %20, %cst_11 [1] : vector<1x8xf32> to vector<1xf32>
    %22 = vector.shape_cast %21 : vector<1xf32> to vector<1x1xf32>
    %23 = vector.broadcast %22 : vector<1x1xf32> to vector<1x8xf32>
    %24 = arith.divf %20, %23 : vector<1x8xf32>
    %c0_12 = arith.constant 0 : index
    %c0_13 = arith.constant 0 : index
    %25 = vector.load %arg3[%c0_12, %c0_13] : memref<2x8xf32, #tpu.memory_space<vmem>>, vector<1x8xf32>
    tpu.vector_store %arg3[%c0_12, %c0_13], %24 {strides = array<i32>} : memref<2x8xf32, #tpu.memory_space<vmem>>, vector<1x8xf32>,
    %c0_14 = arith.constant 0 : index
    %c0_15 = arith.constant 0 : index
    %26 = vector.load %arg1[%c0_14, %c0_15] : memref<16x64xf32, #tpu.memory_space<vmem>>, vector<8x64xf32>
    %cst_16 = arith.constant dense<0.000000e+00> : vector<1x64xf32>
    %27 = tpu.matmul %24, %26, %cst_16 {dimension_numbers = #tpu.dot_dimension_numbers<[1], [0], [0], [1], [0, 0, 1, 1], [], []>} : vector<1x8xf32>, vector<8x64xf32>, vector<1x64xf32> -> vector<1x64xf32>
    %c0_17 = arith.constant 0 : index
    %c0_18 = arith.constant 0 : index
    %28 = vector.load %arg4[%c0_17, %c0_18] : memref<2x64xf32, #tpu.memory_space<vmem>>, vector<1x64xf32>
    tpu.vector_store %arg4[%c0_17, %c0_18], %27 {strides = array<i32>} : memref<2x64xf32, #tpu.memory_space<vmem>>, vector<1x64xf32>,
    %29 = vector.extract_strided_slice %9 {offsets = [8, 0], sizes = [8, 32], strides = [1, 1]} : vector<16x32xf32> to vector<8x32xf32>
    %30 = vector.extract_strided_slice %7 {offsets = [1, 0], sizes = [1, 32], strides = [1, 1]} : vector<2x32xf32> to vector<1x32xf32>
    %31 = vector.broadcast %30 : vector<1x32xf32> to vector<8x32xf32>
    %32 = arith.addf %29, %31 : vector<8x32xf32>
    %33 = math.tanh %32 : vector<8x32xf32>
    %cst_19 = arith.constant dense<0.000000e+00> : vector<1x8xf32>
    %34 = tpu.matmul %3, %33, %cst_19 {dimension_numbers = #tpu.dot_dimension_numbers<[1], [1], [0], [0], [0, 0, 1, 0], [], []>} : vector<1x32xf32>, vector<8x32xf32>, vector<1x8xf32> -> vector<1x8xf32>
    %cst_20 = arith.constant dense<0xFF800000> : vector<1xf32>
    %35 = vector.multi_reduction <maximumf>, %34, %cst_20 [1] : vector<1x8xf32> to vector<1xf32>
    %36 = vector.shape_cast %35 : vector<1xf32> to vector<1x1xf32>
    %37 = vector.broadcast %36 : vector<1x1xf32> to vector<1x8xf32>
    %38 = arith.subf %34, %37 : vector<1x8xf32>
    %39 = math.exp %38 : vector<1x8xf32>
    %cst_21 = arith.constant dense<0.000000e+00> : vector<1xf32>
    %40 = vector.multi_reduction <add>, %39, %cst_21 [1] : vector<1x8xf32> to vector<1xf32>
    %41 = vector.shape_cast %40 : vector<1xf32> to vector<1x1xf32>
    %42 = vector.broadcast %41 : vector<1x1xf32> to vector<1x8xf32>
    %43 = arith.divf %39, %42 : vector<1x8xf32>
    %c1 = arith.constant 1 : index
    %c0_22 = arith.constant 0 : index
    %44 = vector.load %arg3[%c1, %c0_22] : memref<2x8xf32, #tpu.memory_space<vmem>>, vector<1x8xf32>
    tpu.vector_store %arg3[%c1, %c0_22], %43 {strides = array<i32>} : memref<2x8xf32, #tpu.memory_space<vmem>>, vector<1x8xf32>,
    %c8 = arith.constant 8 : index
    %c0_23 = arith.constant 0 : index
    %45 = vector.load %arg1[%c8, %c0_23] : memref<16x64xf32, #tpu.memory_space<vmem>>, vector<8x64xf32>
    %cst_24 = arith.constant dense<0.000000e+00> : vector<1x64xf32>
    %46 = tpu.matmul %43, %45, %cst_24 {dimension_numbers = #tpu.dot_dimension_numbers<[1], [0], [0], [1], [0, 0, 1, 1], [], []>} : vector<1x8xf32>, vector<8x64xf32>, vector<1x64xf32> -> vector<1x64xf32>
    %c1_25 = arith.constant 1 : index
    %c0_26 = arith.constant 0 : index
    %47 = vector.load %arg4[%c1_25, %c0_26] : memref<2x64xf32, #tpu.memory_space<vmem>>, vector<1x64xf32>
    tpu.vector_store %arg4[%c1_25, %c0_26], %46 {strides = array<i32>} : memref<2x64xf32, #tpu.memory_space<vmem>>, vector<1x64xf32>,
    return
  }
}

</mosaic_0001>

<llo_original>
// kernel: attn_forward.1
$region0: #{attn_forward.1}
  #allocation0 [shape = 'u32[]', space=smem, size = 0x4, offset = 0x4, fixed_abs, tag = 'smem constant byte address 0x4 - core index']
  #allocation1 [shape = 'u32[144,128]{1,0:T(1,128)}', space=vmem, size = 0x12000, scoped, tag = 'internal scratch']
  %s0 = inlined_call_operand.vmem [shape: f32[2,32], index: 0, kind: input, shape index: {}]
  %s1 = inlined_call_operand.vmem [shape: f32[16,64], index: 1, kind: input, shape index: {}]
  %s2 = inlined_call_operand.vmem [shape: f32[112,32], index: 2, kind: input, shape index: {}]
  %s3 = inlined_call_operand.hbm [shape: f32[2,8], index: 3, kind: output, shape index: {0}]
  %s4 = inlined_call_operand.hbm [shape: f32[2,64], index: 4, kind: output, shape index: {1}]
  %5 = xla_tuple %s3, %s4
  %s6 = sld [smem:[#allocation0]]
  $region30: #{attn_forward.1} parent=0
    _
  %s8 = ssub.s32 1, %s6
  %s9 = scalar_select 0, %s8, %s6
  $region1: #{attn_forward.1} parent=0
    #allocation2 [shape = 'u8[1024]{0}', space=vmem, size = 0x400, scoped, tag = 'output window, operand 0, single buffered']
    #allocation3 [shape = 's32[1]{0}', space=sflag, size = 0x4, scoped, tag = 'scoped memory for attn_forward.1']
    #allocation4 [shape = 'u8[1024]{0}', space=vmem, size = 0x400, scoped, tag = 'output window, operand 1, single buffered']
    #allocation5 [shape = 's32[1]{0}', space=sflag, size = 0x4, scoped, tag = 'scoped memory for attn_forward.1']
    %10 = vsyncpa [#allocation3], 0
    %11 = vsyncpa [#allocation5], 0
    // Predicated region
    $region2: #{attn_forward.1} parent=1 // pred_check
      _
    $region3: #{attn_forward.1} parent=1 // pred_check_branch
      %13 = sbr.rel (0) target = $region5
    $region4: #{attn_forward.1} parent=1 // pred_region
      _
    $region5: #{attn_forward.1} parent=1 // pred_fallthru
      _
    // Predicated region
    $region6: #{attn_forward.1} parent=1 // pred_check
      _
    $region7: #{attn_forward.1} parent=1 // pred_check_branch
      %15 = sbr.rel (0) target = $region9
    $region8: #{attn_forward.1} parent=1 // pred_region
      _
    $region9: #{attn_forward.1} parent=1 // pred_fallthru
      _
    // Predicated region
    $region10: #{attn_forward.1} parent=1 // pred_check
      _
    $region11: #{attn_forward.1} parent=1 // pred_check_branch
      %17 = sbr.rel (0) target = $region13
    $region12: #{attn_forward.1} parent=1 // pred_region
      _
    $region13: #{attn_forward.1} parent=1 // pred_fallthru
      _
    %v18 = vld [vmem:[%s2] sm:$0xff]
    %v19 = vld [vmem:[%s2 + $0x8] sm:$0xff]
    %v20 = vld [vmem:[%s2 + $0x10] sm:$0xff]
    %v21 = vld [vmem:[%s2 + $0x18] sm:$0xff]
    %v22 = vld [vmem:[%s2 + $0x20] sm:$0xff]
    %v23 = vld [vmem:[%s2 + $0x28] sm:$0xff]
    %v24 = vld [vmem:[%s2 + $0x30] sm:$0xff]
    %v25 = vld [vmem:[%s2 + $0x38] sm:$0xff]
    %v26 = vld [vmem:[%s2 + $0x40] sm:$0xff]
    %v27 = vld [vmem:[%s2 + $0x48] sm:$0xff]
    %v28 = vld [vmem:[%s2 + $0x50] sm:$0xff]
    %v29 = vld [vmem:[%s2 + $0x58] sm:$0xff]
    %v30 = vld [vmem:[%s2 + $0x60] sm:$0x1]
    %v31 = vld [vmem:[%s2 + $0x68] sm:$0x1]
    %v32 = vld [vmem:[%s0] sm:$0x3]
    %v33 = vlaneseq
    %v34 = vshrl.u32 %v33, 7
    %v35 = vsub.s32 0, %v34
    %v36 = vrot.slane %v30, %v35
    %vm37 = vcmask 261120
    %v39 = vsel %vm37, %v32, 0
    %41 = vmatprep.subr.mxu0 0.0
    %42 = vmatpush1.msra.mxu0 %v18
    %43 = vmatprep.subr.mxu0 0.0
    %44 = vmatpush1.msra.mxu0 %v19
    %45 = vmatprep.subr.mxu0 0.0
    %46 = vmatpush1.msra.mxu0 %v20
    %47 = vmatprep.subr.mxu0 0.0
    %48 = vmatpush1.msra.mxu0 %v21
    %49 = vmatprep.subr.mxu0 0.0
    %50 = vmatpush1.msra.mxu0 0.0
    %51 = vmatprep.subr.mxu0 0.0
    %52 = vmatpush1.msra.mxu0 0.0
    %53 = vmatprep.subr.mxu0 0.0
    %54 = vmatpush1.msra.mxu0 0.0
    %55 = vmatprep.subr.mxu0 0.0
    %56 = vmatpush1.msra.mxu0 0.0
    %57 = vmatprep.subr.mxu0 0.0
    %58 = vmatpush1.msra.mxu0 0.0
    %59 = vmatprep.subr.mxu0 0.0
    %60 = vmatpush1.msra.mxu0 0.0
    %61 = vmatprep.subr.mxu0 0.0
    %62 = vmatpush1.msra.mxu0 0.0
    %63 = vmatprep.subr.mxu0 0.0
    %64 = vmatpush1.msra.mxu0 0.0
    %65 = vmatprep.subr.mxu0 0.0
    %66 = vmatpush1.msra.mxu0 0.0
    %67 = vmatprep.subr.mxu0 0.0
    %68 = vmatpush1.msra.mxu0 0.0
    %69 = vmatprep.subr.mxu0 0.0
    %70 = vmatpush1.msra.mxu0 0.0
    %71 = vmatprep.subr.mxu0 0.0
    %72 = vmatpush1.msra.mxu0 0.0
    %73 = vmatprep.subr.mxu0 0.0
    %74 = vmatpush1.msra.mxu0 0.0
    %75 = vmatprep.subr.mxu0 0.0
    %76 = vmatpush1.msra.mxu0 0.0
    %77 = vmatprep.subr.mxu0 0.0
    %78 = vmatpush1.msra.mxu0 0.0
    %79 = vmatprep.subr.mxu0 0.0
    %80 = vmatpush1.msra.mxu0 0.0
    %81 = vmatprep.subr.mxu0 0.0
    %82 = vmatpush1.msra.mxu0 0.0
    %83 = vmatprep.subr.mxu0 0.0
    %84 = vmatpush1.msra.mxu0 0.0
    %85 = vmatprep.subr.mxu0 0.0
    %86 = vmatpush1.msra.mxu0 0.0
    %87 = vmatprep.subr.mxu0 0.0
    %88 = vmatpush1.msra.mxu0 0.0
    %89 = vmatprep.subr.mxu0 0.0
    %90 = vmatpush1.msra.mxu0 0.0
    %91 = vmatprep.subr.mxu0 0.0
    %92 = vmatpush1.msra.mxu0 0.0
    %93 = vmatprep.subr.mxu0 0.0
    %94 = vmatpush1.msra.mxu0 0.0
    %95 = vmatprep.subr.mxu0 0.0
    %96 = vmatpush1.msra.mxu0 0.0
    %97 = vmatprep.subr.mxu0 0.0
    %98 = vmatpush1.msra.mxu0 0.0
    %99 = vmatprep.subr.mxu0 0.0
    %100 = vmatpush1.msra.mxu0 0.0
    %101 = vmatprep.subr.mxu0 0.0
    %102 = vmatpush1.msra.mxu0 0.0
    %103 = vmatprep.subr.mxu0 0.0
    %104 = vmatpush1.msra.mxu0 0.0
    %105 = vmatprep.mubr.f32.mxu0 0.0
    %106 = vmatmul.mubr.f32.gmra.mrb[0].mxu0 %v39
    %v107 = vpop.f32.mrb[0].mxu0
    %v108 = vadd.f32 %v36, %v107
    %v109 = vpop.f32.mrb[0].mxu0
    %110 = vdwg.mxu0
    %v111 = vld [vmem:[%s1] sm:$0xff]
    %v112 = vld [vmem:[%s1 + $0x8] sm:$0xff]
    %vm113 = vcmask 523264
    %v115 = vsel %vm113, %v111, 0
    %v118 = vsel %vm113, %v112, 0
    %120 = vmatprep.subr.mxu0 0.0
    %121 = vmatpush1.msra.mxu0 %v22
    %122 = vmatprep.subr.mxu0 0.0
    %123 = vmatpush1.msra.mxu0 %v23
    %124 = vmatprep.subr.mxu0 0.0
    %125 = vmatpush1.msra.mxu0 %v24
    %126 = vmatprep.subr.mxu0 0.0
    %127 = vmatpush1.msra.mxu0 %v25
    %128 = vmatprep.subr.mxu0 0.0
    %129 = vmatpush1.msra.mxu0 %v26
    %130 = vmatprep.subr.mxu0 0.0
    %131 = vmatpush1.msra.mxu0 %v27
    %132 = vmatprep.subr.mxu0 0.0
    %133 = vmatpush1.msra.mxu0 %v28
    %134 = vmatprep.subr.mxu0 0.0
    %135 = vmatpush1.msra.mxu0 %v29
    %136 = vmatprep.subr.mxu0 0.0
    %137 = vmatpush1.msra.mxu0 0.0
    %138 = vmatprep.subr.mxu0 0.0
    %139 = vmatpush1.msra.mxu0 0.0
    %140 = vmatprep.subr.mxu0 0.0
    %141 = vmatpush1.msra.mxu0 0.0
    %142 = vmatprep.subr.mxu0 0.0
    %143 = vmatpush1.msra.mxu0 0.0
    %144 = vmatprep.subr.mxu0 0.0
    %145 = vmatpush1.msra.mxu0 0.0
    %146 = vmatprep.subr.mxu0 0.0
    %147 = vmatpush1.msra.mxu0 0.0
    %148 = vmatprep.subr.mxu0 0.0
    %149 = vmatpush1.msra.mxu0 0.0
    %150 = vmatprep.subr.mxu0 0.0
    %151 = vmatpush1.msra.mxu0 0.0
    %152 = vmatprep.subr.mxu0 0.0
    %153 = vmatpush1.msra.mxu0 0.0
    %154 = vmatprep.subr.mxu0 0.0
    %155 = vmatpush1.msra.mxu0 0.0
    %156 = vmatprep.subr.mxu0 0.0
    %157 = vmatpush1.msra.mxu0 0.0
    %158 = vmatprep.subr.mxu0 0.0
    %159 = vmatpush1.msra.mxu0 0.0
    %160 = vmatprep.subr.mxu0 0.0
    %161 = vmatpush1.msra.mxu0 0.0
    %162 = vmatprep.subr.mxu0 0.0
    %163 = vmatpush1.msra.mxu0 0.0
    %164 = vmatprep.subr.mxu0 0.0
    %165 = vmatpush1.msra.mxu0 0.0
    %166 = vmatprep.subr.mxu0 0.0
    %167 = vmatpush1.msra.mxu0 0.0
    %168 = vmatprep.subr.mxu0 0.0
    %169 = vmatpush1.msra.mxu0 0.0
    %170 = vmatprep.subr.mxu0 0.0
    %171 = vmatpush1.msra.mxu0 0.0
    %172 = vmatprep.subr.mxu0 0.0
    %173 = vmatpush1.msra.mxu0 0.0
    %174 = vmatprep.subr.mxu0 0.0
    %175 = vmatpush1.msra.mxu0 0.0
    %176 = vmatprep.subr.mxu0 0.0
    %177 = vmatpush1.msra.mxu0 0.0
    %178 = vmatprep.subr.mxu0 0.0
    %179 = vmatpush1.msra.mxu0 0.0
    %180 = vmatprep.subr.mxu0 0.0
    %181 = vmatpush1.msra.mxu0 0.0
    %182 = vmatprep.subr.mxu0 0.0
    %183 = vmatpush1.msra.mxu0 0.0
    %184 = vmatprep.mubr.f32.mxu0 0.0
    %185 = vmatmul.mubr.f32.gmra.mrb[0].mxu0 %v115
    %v186 = vpop.f32.mrb[0].mxu0
    %v187 = vadd.f32 0.0, %v186
    %v188 = vpop.f32.mrb[0].mxu0
    %189 = vmatprep.mubr.f32.mxu0 0.0
    %190 = vmatmul.mubr.f32.gmra.mrb[0].mxu0 %v118
    %v191 = vpop.f32.mrb[0].mxu0
    %v192 = vadd.f32 0.0, %v191
    %v193 = vpop.f32.mrb[0].mxu0
    %194 = vdwg.mxu0
    %v195 = vlaneseq
    %v196 = vshrl.u32 %v195, 7
    %v197 = vsub.s32 0, %v196
    %v198 = vrot.slane %v108, %v197
    %v199 = vadd.f32 %v187, %v198
    %v200 = vtanh.pop %v199
    %v202 = vsel %vm37, %v31, 0
    %v205 = vsel %vm37, %v200, 0
    %207 = vmatprep.subr.mxu0 0.0
    %208 = vmatpush1.xpose.msra.mxu0 %v205
    %209 = vmatprep.subr.mxu0 0.0
    %210 = vmatpush1.xpose.msra.mxu0 0.0
    %211 = vmatprep.subr.mxu0 0.0
    %212 = vmatpush1.xpose.msra.mxu0 0.0
    %213 = vmatprep.subr.mxu0 0.0
    %214 = vmatpush1.xpose.msra.mxu0 0.0
    %215 = vmatprep.subr.mxu0 0.0
    %216 = vmatpush1.xpose.msra.mxu0 0.0
    %217 = vmatprep.subr.mxu0 0.0
    %218 = vmatpush1.xpose.msra.mxu0 0.0
    %219 = vmatprep.subr.mxu0 0.0
    %220 = vmatpush1.xpose.msra.mxu0 0.0
    %221 = vmatprep.subr.mxu0 0.0
    %222 = vmatpush1.xpose.msra.mxu0 0.0
    %223 = vmatprep.subr.mxu0 0.0
    %224 = vmatpush1.xpose.msra.mxu0 0.0
    %225 = vmatprep.subr.mxu0 0.0
    %226 = vmatpush1.xpose.msra.mxu0 0.0
    %227 = vmatprep.subr.mxu0 0.0
    %228 = vmatpush1.xpose.msra.mxu0 0.0
    %229 = vmatprep.subr.mxu0 0.0
    %230 = vmatpush1.xpose.msra.mxu0 0.0
    %231 = vmatprep.subr.mxu0 0.0
    %232 = vmatpush1.xpose.msra.mxu0 0.0
    %233 = vmatprep.subr.mxu0 0.0
    %234 = vmatpush1.xpose.msra.mxu0 0.0
    %235 = vmatprep.subr.mxu0 0.0
    %236 = vmatpush1.xpose.msra.mxu0 0.0
    %237 = vmatprep.subr.mxu0 0.0
    %238 = vmatpush1.xpose.msra.mxu0 0.0
    %239 = vmatprep.subr.mxu0 0.0
    %240 = vmatpush1.xpose.msra.mxu0 0.0
    %241 = vmatprep.subr.mxu0 0.0
    %242 = vmatpush1.xpose.msra.mxu0 0.0
    %243 = vmatprep.subr.mxu0 0.0
    %244 = vmatpush1.xpose.msra.mxu0 0.0
    %245 = vmatprep.subr.mxu0 0.0
    %246 = vmatpush1.xpose.msra.mxu0 0.0
    %247 = vmatprep.subr.mxu0 0.0
    %248 = vmatpush1.xpose.msra.mxu0 0.0
    %249 = vmatprep.subr.mxu0 0.0
    %250 = vmatpush1.xpose.msra.mxu0 0.0
    %251 = vmatprep.subr.mxu0 0.0
    %252 = vmatpush1.xpose.msra.mxu0 0.0
    %253 = vmatprep.subr.mxu0 0.0
    %254 = vmatpush1.xpose.msra.mxu0 0.0
    %255 = vmatprep.subr.mxu0 0.0
    %256 = vmatpush1.xpose.msra.mxu0 0.0
    %257 = vmatprep.subr.mxu0 0.0
    %258 = vmatpush1.xpose.msra.mxu0 0.0
    %259 = vmatprep.subr.mxu0 0.0
    %260 = vmatpush1.xpose.msra.mxu0 0.0
    %261 = vmatprep.subr.mxu0 0.0
    %262 = vmatpush1.xpose.msra.mxu0 0.0
    %263 = vmatprep.subr.mxu0 0.0
    %264 = vmatpush1.xpose.msra.mxu0 0.0
    %265 = vmatprep.subr.mxu0 0.0
    %266 = vmatpush1.xpose.msra.mxu0 0.0
    %267 = vmatprep.subr.mxu0 0.0
    %268 = vmatpush1.xpose.msra.mxu0 0.0
    %269 = vmatprep.subr.mxu0 0.0
    %270 = vmatpush1.xpose.msra.mxu0 0.0
    %271 = vmatprep.mubr.f32.mxu0 0.0
    %272 = vmatmul.mubr.f32.gmra.mrb[0].mxu0 %v202
    %v273 = vpop.f32.mrb[0].mxu0
    %v274 = vadd.f32 0.0, %v273
    %v275 = vpop.f32.mrb[0].mxu0
    %276 = vdwg.mxu0
    %vm277 = vcmask 57344
    %v278 = vsel %vm277, %v274, -inf
    %279 = vmax.xlane.f32.xlu0 %v278
    %v280 = vpop.xlane.xlu0 %279
    %v281 = vsub.f32 %v274, %v280
    %v282 = vmul.f32 %v281, 1.442695
    %v283 = vpow.pop %v282
    %v284 = vsel %vm277, %v283, 0.0
    %285 = vadd.xlane.f32.xlu0 %v284
    %v286 = vpop.xlane.xlu0 %285
    %v287 = vrcp.pop %v286
    %v288 = vmul.f32 %v283, %v287
    %289 = vst.msk [vmem:[#allocation2] sm:$0x1] %vm277, %v288
    %v290 = vld [vmem:[%s1] sm:$0xff]
    %vm291 = vcmask 64512
    %v293 = vsel %vm291, %v288, 0
    %295 = vmatprep.subr.mxu0 0.0
    %296 = vmatpush1.msra.mxu0 %v290
    %297 = vmatprep.subr.mxu0 0.0
    %298 = vmatpush1.msra.mxu0 0.0
    %299 = vmatprep.subr.mxu0 0.0
    %300 = vmatpush1.msra.mxu0 0.0
    %301 = vmatprep.subr.mxu0 0.0
    %302 = vmatpush1.msra.mxu0 0.0
    %303 = vmatprep.subr.mxu0 0.0
    %304 = vmatpush1.msra.mxu0 0.0
    %305 = vmatprep.subr.mxu0 0.0
    %306 = vmatpush1.msra.mxu0 0.0
    %307 = vmatprep.subr.mxu0 0.0
    %308 = vmatpush1.msra.mxu0 0.0
    %309 = vmatprep.subr.mxu0 0.0
    %310 = vmatpush1.msra.mxu0 0.0
    %311 = vmatprep.subr.mxu0 0.0
    %312 = vmatpush1.msra.mxu0 0.0
    %313 = vmatprep.subr.mxu0 0.0
    %314 = vmatpush1.msra.mxu0 0.0
    %315 = vmatprep.subr.mxu0 0.0
    %316 = vmatpush1.msra.mxu0 0.0
    %317 = vmatprep.subr.mxu0 0.0
    %318 = vmatpush1.msra.mxu0 0.0
    %319 = vmatprep.subr.mxu0 0.0
    %320 = vmatpush1.msra.mxu0 0.0
    %321 = vmatprep.subr.mxu0 0.0
    %322 = vmatpush1.msra.mxu0 0.0
    %323 = vmatprep.subr.mxu0 0.0
    %324 = vmatpush1.msra.mxu0 0.0
    %325 = vmatprep.subr.mxu0 0.0
    %326 = vmatpush1.msra.mxu0 0.0
    %327 = vmatprep.subr.mxu0 0.0
    %328 = vmatpush1.msra.mxu0 0.0
    %329 = vmatprep.subr.mxu0 0.0
    %330 = vmatpush1.msra.mxu0 0.0
    %331 = vmatprep.subr.mxu0 0.0
    %332 = vmatpush1.msra.mxu0 0.0
    %333 = vmatprep.subr.mxu0 0.0
    %334 = vmatpush1.msra.mxu0 0.0
    %335 = vmatprep.subr.mxu0 0.0
    %336 = vmatpush1.msra.mxu0 0.0
    %337 = vmatprep.subr.mxu0 0.0
    %338 = vmatpush1.msra.mxu0 0.0
    %339 = vmatprep.subr.mxu0 0.0
    %340 = vmatpush1.msra.mxu0 0.0
    %341 = vmatprep.subr.mxu0 0.0
    %342 = vmatpush1.msra.mxu0 0.0
    %343 = vmatprep.subr.mxu0 0.0
    %344 = vmatpush1.msra.mxu0 0.0
    %345 = vmatprep.subr.mxu0 0.0
    %346 = vmatpush1.msra.mxu0 0.0
    %347 = vmatprep.subr.mxu0 0.0
    %348 = vmatpush1.msra.mxu0 0.0
    %349 = vmatprep.subr.mxu0 0.0
    %350 = vmatpush1.msra.mxu0 0.0
    %351 = vmatprep.subr.mxu0 0.0
    %352 = vmatpush1.msra.mxu0 0.0
    %353 = vmatprep.subr.mxu0 0.0
    %354 = vmatpush1.msra.mxu0 0.0
    %355 = vmatprep.subr.mxu0 0.0
    %356 = vmatpush1.msra.mxu0 0.0
    %357 = vmatprep.subr.mxu0 0.0
    %358 = vmatpush1.msra.mxu0 0.0
    %359 = vmatprep.mubr.f32.mxu0 0.0
    %360 = vmatmul.mubr.f32.gmra.mrb[0].mxu0 %v293
    %v361 = vpop.f32.mrb[0].mxu0
    %v362 = vadd.f32 0.0, %v361
    %v363 = vpop.f32.mrb[0].mxu0
    %364 = vdwg.mxu0
    %vm365 = vcmask 516096
    %366 = vst.msk [vmem:[#allocation4] sm:$0x1] %vm365, %v362
    %v367 = vlaneseq
    %v368 = vshrl.u32 %v367, 7
    %v369 = vsub.s32 1, %v368
    %v370 = vrot.slane %v108, %v369
    %v371 = vadd.f32 %v192, %v370
    %v372 = vtanh.pop %v371
    %v374 = vsel %vm37, %v372, 0
    %376 = vmatprep.subr.mxu0 0.0
    %377 = vmatpush1.xpose.msra.mxu0 %v374
    %378 = vmatprep.subr.mxu0 0.0
    %379 = vmatpush1.xpose.msra.mxu0 0.0
    %380 = vmatprep.subr.mxu0 0.0
    %381 = vmatpush1.xpose.msra.mxu0 0.0
    %382 = vmatprep.subr.mxu0 0.0
    %383 = vmatpush1.xpose.msra.mxu0 0.0
    %384 = vmatprep.subr.mxu0 0.0
    %385 = vmatpush1.xpose.msra.mxu0 0.0
    %386 = vmatprep.subr.mxu0 0.0
    %387 = vmatpush1.xpose.msra.mxu0 0.0
    %388 = vmatprep.subr.mxu0 0.0
    %389 = vmatpush1.xpose.msra.mxu0 0.0
    %390 = vmatprep.subr.mxu0 0.0
    %391 = vmatpush1.xpose.msra.mxu0 0.0
    %392 = vmatprep.subr.mxu0 0.0
    %393 = vmatpush1.xpose.msra.mxu0 0.0
    %394 = vmatprep.subr.mxu0 0.0
    %395 = vmatpush1.xpose.msra.mxu0 0.0
    %396 = vmatprep.subr.mxu0 0.0
    %397 = vmatpush1.xpose.msra.mxu0 0.0
    %398 = vmatprep.subr.mxu0 0.0
    %399 = vmatpush1.xpose.msra.mxu0 0.0
    %400 = vmatprep.subr.mxu0 0.0
    %401 = vmatpush1.xpose.msra.mxu0 0.0
    %402 = vmatprep.subr.mxu0 0.0
    %403 = vmatpush1.xpose.msra.mxu0 0.0
    %404 = vmatprep.subr.mxu0 0.0
    %405 = vmatpush1.xpose.msra.mxu0 0.0
    %406 = vmatprep.subr.mxu0 0.0
    %407 = vmatpush1.xpose.msra.mxu0 0.0
    %408 = vmatprep.subr.mxu0 0.0
    %409 = vmatpush1.xpose.msra.mxu0 0.0
    %410 = vmatprep.subr.mxu0 0.0
    %411 = vmatpush1.xpose.msra.mxu0 0.0
    %412 = vmatprep.subr.mxu0 0.0
    %413 = vmatpush1.xpose.msra.mxu0 0.0
    %414 = vmatprep.subr.mxu0 0.0
    %415 = vmatpush1.xpose.msra.mxu0 0.0
    %416 = vmatprep.subr.mxu0 0.0
    %417 = vmatpush1.xpose.msra.mxu0 0.0
    %418 = vmatprep.subr.mxu0 0.0
    %419 = vmatpush1.xpose.msra.mxu0 0.0
    %420 = vmatprep.subr.mxu0 0.0
    %421 = vmatpush1.xpose.msra.mxu0 0.0
    %422 = vmatprep.subr.mxu0 0.0
    %423 = vmatpush1.xpose.msra.mxu0 0.0
    %424 = vmatprep.subr.mxu0 0.0
    %425 = vmatpush1.xpose.msra.mxu0 0.0
    %426 = vmatprep.subr.mxu0 0.0
    %427 = vmatpush1.xpose.msra.mxu0 0.0
    %428 = vmatprep.subr.mxu0 0.0
    %429 = vmatpush1.xpose.msra.mxu0 0.0
    %430 = vmatprep.subr.mxu0 0.0
    %431 = vmatpush1.xpose.msra.mxu0 0.0
    %432 = vmatprep.subr.mxu0 0.0
    %433 = vmatpush1.xpose.msra.mxu0 0.0
    %434 = vmatprep.subr.mxu0 0.0
    %435 = vmatpush1.xpose.msra.mxu0 0.0
    %436 = vmatprep.subr.mxu0 0.0
    %437 = vmatpush1.xpose.msra.mxu0 0.0
    %438 = vmatprep.subr.mxu0 0.0
    %439 = vmatpush1.xpose.msra.mxu0 0.0
    %440 = vmatprep.mubr.f32.mxu0 0.0
    %441 = vmatmul.mubr.f32.gmra.mrb[0].mxu0 %v202
    %v442 = vpop.f32.mrb[0].mxu0
    %v443 = vadd.f32 0.0, %v442
    %v444 = vpop.f32.mrb[0].mxu0
    %445 = vdwg.mxu0
    %v446 = vsel %vm277, %v443, -inf
    %447 = vmax.xlane.f32.xlu0 %v446
    %v448 = vpop.xlane.xlu0 %447
    %v449 = vsub.f32 %v443, %v448
    %v450 = vmul.f32 %v449, 1.442695
    %v451 = vpow.pop %v450
    %v452 = vsel %vm277, %v451, 0.0
    %453 = vadd.xlane.f32.xlu0 %v452
    %v454 = vpop.xlane.xlu0 %453
    %v455 = vrcp.pop %v454
    %v456 = vmul.f32 %v451, %v455
    %457 = vst.msk [vmem:[#allocation2 + $0x1] sm:$0x1] %vm277, %v456
    %v458 = vld [vmem:[%s1 + $0x8] sm:$0xff]
    %v460 = vsel %vm291, %v456, 0
    %462 = vmatprep.subr.mxu0 0.0
    %463 = vmatpush1.msra.mxu0 %v458
    %464 = vmatprep.subr.mxu0 0.0
    %465 = vmatpush1.msra.mxu0 0.0
    %466 = vmatprep.subr.mxu0 0.0
    %467 = vmatpush1.msra.mxu0 0.0
    %468 = vmatprep.subr.mxu0 0.0
    %469 = vmatpush1.msra.mxu0 0.0
    %470 = vmatprep.subr.mxu0 0.0
    %471 = vmatpush1.msra.mxu0 0.0
    %472 = vmatprep.subr.mxu0 0.0
    %473 = vmatpush1.msra.mxu0 0.0
    %474 = vmatprep.subr.mxu0 0.0
    %475 = vmatpush1.msra.mxu0 0.0
    %476 = vmatprep.subr.mxu0 0.0
    %477 = vmatpush1.msra.mxu0 0.0
    %478 = vmatprep.subr.mxu0 0.0
    %479 = vmatpush1.msra.mxu0 0.0
    %480 = vmatprep.subr.mxu0 0.0
    %481 = vmatpush1.msra.mxu0 0.0
    %482 = vmatprep.subr.mxu0 0.0
    %483 = vmatpush1.msra.mxu0 0.0
    %484 = vmatprep.subr.mxu0 0.0
    %485 = vmatpush1.msra.mxu0 0.0
    %486 = vmatprep.subr.mxu0 0.0
    %487 = vmatpush1.msra.mxu0 0.0
    %488 = vmatprep.subr.mxu0 0.0
    %489 = vmatpush1.msra.mxu0 0.0
    %490 = vmatprep.subr.mxu0 0.0
    %491 = vmatpush1.msra.mxu0 0.0
    %492 = vmatprep.subr.mxu0 0.0
    %493 = vmatpush1.msra.mxu0 0.0
    %494 = vmatprep.subr.mxu0 0.0
    %495 = vmatpush1.msra.mxu0 0.0
    %496 = vmatprep.subr.mxu0 0.0
    %497 = vmatpush1.msra.mxu0 0.0
    %498 = vmatprep.subr.mxu0 0.0
    %499 = vmatpush1.msra.mxu0 0.0
    %500 = vmatprep.subr.mxu0 0.0
    %501 = vmatpush1.msra.mxu0 0.0
    %502 = vmatprep.subr.mxu0 0.0
    %503 = vmatpush1.msra.mxu0 0.0
    %504 = vmatprep.subr.mxu0 0.0
    %505 = vmatpush1.msra.mxu0 0.0
    %506 = vmatprep.subr.mxu0 0.0
    %507 = vmatpush1.msra.mxu0 0.0
    %508 = vmatprep.subr.mxu0 0.0
    %509 = vmatpush1.msra.mxu0 0.0
    %510 = vmatprep.subr.mxu0 0.0
    %511 = vmatpush1.msra.mxu0 0.0
    %512 = vmatprep.subr.mxu0 0.0
    %513 = vmatpush1.msra.mxu0 0.0
    %514 = vmatprep.subr.mxu0 0.0
    %515 = vmatpush1.msra.mxu0 0.0
    %516 = vmatprep.subr.mxu0 0.0
    %517 = vmatpush1.msra.mxu0 0.0
    %518 = vmatprep.subr.mxu0 0.0
    %519 = vmatpush1.msra.mxu0 0.0
    %520 = vmatprep.subr.mxu0 0.0
    %521 = vmatpush1.msra.mxu0 0.0
    %522 = vmatprep.subr.mxu0 0.0
    %523 = vmatpush1.msra.mxu0 0.0
    %524 = vmatprep.subr.mxu0 0.0
    %525 = vmatpush1.msra.mxu0 0.0
    %526 = vmatprep.mubr.f32.mxu0 0.0
    %527 = vmatmul.mubr.f32.gmra.mrb[0].mxu0 %v460
    %v528 = vpop.f32.mrb[0].mxu0
    %v529 = vadd.f32 0.0, %v528
    %v530 = vpop.f32.mrb[0].mxu0
    %531 = vdwg.mxu0
    %532 = vst.msk [vmem:[#allocation4 + $0x1] sm:$0x1] %vm365, %v529
    // Predicated region
    $region14: #{attn_forward.1} parent=1 // pred_check
      _
    $region15: #{attn_forward.1} parent=1 // pred_check_branch
      %534 = sbr.rel (0) target = $region17
    $region16: #{attn_forward.1} parent=1 // pred_region
      %s536 = ssub.s32 32, 32
      %537 = vsyncadd [#allocation3], %s536
      %s539 = sshll.u32 [#allocation2], 4
      %s540 = int_to_ptr.vmem [resolvable:$true] %s539
      %542 = dma.vmem_to_hbm [thread:$0]  %s540, 32, %s3, [#allocation3]
    $region17: #{attn_forward.1} parent=1 // pred_fallthru
      _
    // Predicated region
    $region18: #{attn_forward.1} parent=1 // pred_check
      _
    $region19: #{attn_forward.1} parent=1 // pred_check_branch
      %544 = sbr.rel (0) target = $region21
    $region20: #{attn_forward.1} parent=1 // pred_region
      %s546 = ssub.s32 32, 32
      %547 = vsyncadd [#allocation5], %s546
      %s549 = sshll.u32 [#allocation4], 4
      %s550 = int_to_ptr.vmem [resolvable:$true] %s549
      %552 = dma.vmem_to_hbm [thread:$0]  %s550, 32, %s4, [#allocation5]
    $region21: #{attn_forward.1} parent=1 // pred_fallthru
      _
    // Predicated region
    $region22: #{attn_forward.1} parent=1 // pred_check
      _
    $region23: #{attn_forward.1} parent=1 // pred_check_branch
      %554 = sbr.rel (0) target = $region25
    $region24: #{attn_forward.1} parent=1 // pred_region
      %555 = dma.done [#allocation3], 32
    $region25: #{attn_forward.1} parent=1 // pred_fallthru
      _
    // Predicated region
    $region26: #{attn_forward.1} parent=1 // pred_check
      _
    $region27: #{attn_forward.1} parent=1 // pred_check_branch
      %557 = sbr.rel (0) target = $region29
    $region28: #{attn_forward.1} parent=1 // pred_region
      %558 = dma.done [#allocation5], 32
    $region29: #{attn_forward.1} parent=1 // pred_fallthru
      _
    %559 = vsyncpa [#allocation3], 1
    %560 = vsyncpa [#allocation5], 1

</llo_original>
